<compile_context>
chip_gen: v6e
topology: v6e:2x2x1
jax: 0.10.0
libtpu: 0.0.40
codegen_flags: <defaults>
</compile_context>

<pallas_src>
import functools

import jax
import jax.numpy as jnp
import numpy as np
from jax.experimental import pallas as pl
from jax.experimental.pallas import tpu as pltpu


# ----------------------------------------------------------------------------
# In-kernel helpers
# ----------------------------------------------------------------------------

def _conv3x3(pad_ref, w_ref, b_ref, extra=None, *, use_slab):
    """3x3 'same' conv of the padded (T+2, W+2, C) bf16 scratch -> (T*W, Cout) f32.

    use_slab=True : single im2col matmul with K = 9C (+Cin for the folded 1x1
                    projection) -- only for small C where short K streams dominate.
    use_slab=False: per-tap K=C matmuls accumulated in f32 (no 9x activation slab).
    `extra` is an optional (T*W, Cextra) bf16 operand appended as a final tap
    (used to fold the 1x1 residual projection into conv2).
    """
    Tp, Wp, C = pad_ref.shape
    T, W = Tp - 2, Wp - 2
    taps = [pad_ref[kh:kh + T, kw:kw + W, :].reshape(T * W, C)
            for kh in range(3) for kw in range(3)]
    if extra is not None:
        taps.append(extra)
    if use_slab:
        slab = jnp.concatenate(taps, axis=-1)
        acc = jnp.dot(slab, w_ref[...], preferred_element_type=jnp.float32)
    else:
        acc = None
        off = 0
        for t in taps:
            k = t.shape[1]
            p = jnp.dot(t, w_ref[off:off + k, :],
                        preferred_element_type=jnp.float32)
            acc = p if acc is None else acc + p
            off += k
    return acc + b_ref[...]


def _finalize_gn(gsum_ref, gssq_ref, g2c_ref, gamma_ref, beta_ref, inv_count, eps):
    """Turn carried per-group sums into per-channel (scale, shift) vectors."""
    mean_g = gsum_ref[...] * inv_count                               # (1, G)
    var_g = gssq_ref[...] * inv_count - mean_g * mean_g              # E[x^2]-E[x]^2
    inv_g = jax.lax.rsqrt(var_g + eps)
    mean_c = jnp.dot(mean_g, g2c_ref[...], preferred_element_type=jnp.float32)
    inv_c = jnp.dot(inv_g, g2c_ref[...], preferred_element_type=jnp.float32)
    sc = gamma_ref[...] * inv_c                                      # (1, C)
    sh = beta_ref[...] - mean_c * sc
    return sc, sh


# ----------------------------------------------------------------------------
# Pass 1: GroupNorm1 statistics (per-group running sums carried across strips)
# ----------------------------------------------------------------------------

def _gn_stats_kernel(x_ref, gamma_ref, beta_ref, c2g_ref, g2c_ref,
                     scale_ref, shift_ref, gsum_ref, gssq_ref, *, eps, inv_count):
    s = pl.program_id(1)
    last = pl.num_programs(1) - 1
    _, T, W, C = x_ref.shape

    @pl.when(s == 0)
    def _init():
        gsum_ref[...] = jnp.zeros_like(gsum_ref)
        gssq_ref[...] = jnp.zeros_like(gssq_ref)

    v = x_ref[0].reshape(T * W, C).astype(jnp.float32)
    cs = jnp.sum(v, axis=0, keepdims=True)                           # (1, C)
    css = jnp.sum(v * v, axis=0, keepdims=True)
    gsum_ref[...] += jnp.dot(cs, c2g_ref[...], preferred_element_type=jnp.float32)
    gssq_ref[...] += jnp.dot(css, c2g_ref[...], preferred_element_type=jnp.float32)

    @pl.when(s == last)
    def _finalize():
        sc, sh = _finalize_gn(gsum_ref, gssq_ref, g2c_ref, gamma_ref, beta_ref,
                              inv_count, eps)
        scale_ref[0] = sc
        shift_ref[0] = sh


# ----------------------------------------------------------------------------
# Pass 2: GN1-affine + ReLU + conv1 (per strip) + GN2 running statistics
# ----------------------------------------------------------------------------

def _gn1_conv1_kernel(x_ref, xt_ref, xb_ref, sc1_ref, sh1_ref,
                      w1_ref, b1_ref, gamma2_ref, beta2_ref, c2g2_ref, g2c2_ref,
                      h_ref, sc2_ref, sh2_ref,
                      pad_ref, gsum_ref, gssq_ref, *, eps, inv_count, use_slab):
    s = pl.program_id(1)
    last = pl.num_programs(1) - 1
    _, T, W, Cin = x_ref.shape
    Cout = h_ref.shape[3]

    # Only the two W-border columns ever need zeroing (halo rows 0 / T+1 interiors
    # are rewritten every step).  Done once per sample, not per step.
    @pl.when(s == 0)
    def _init():
        zcol = jnp.zeros((T + 2, 1, Cin), dtype=pad_ref.dtype)
        pad_ref[:, 0:1, :] = zcol
        pad_ref[:, W + 1:W + 2, :] = zcol
        gsum_ref[...] = jnp.zeros_like(gsum_ref)
        gssq_ref[...] = jnp.zeros_like(gssq_ref)

    scale = sc1_ref[0]                                               # (1, Cin)
    shift = sh1_ref[0]

    def gn_relu(v):                                                  # (rows, W, Cin)
        y = jnp.maximum(v * scale + shift, 0.0)
        return y.astype(pad_ref.dtype)

    body = gn_relu(x_ref[0].astype(jnp.float32))
    top = gn_relu(xt_ref[0].astype(jnp.float32))
    bot = gn_relu(xb_ref[0].astype(jnp.float32))
    # conv1's zero padding applies to relu(gn1(x)), so zero halo rows at image edges.
    top = jnp.where(s > 0, top, jnp.zeros_like(top))
    bot = jnp.where(s < last, bot, jnp.zeros_like(bot))

    pad_ref[0:1, 1:W + 1, :] = top
    pad_ref[1:T + 1, 1:W + 1, :] = body
    pad_ref[T + 1:T + 2, 1:W + 1, :] = bot

    h = _conv3x3(pad_ref, w1_ref, b1_ref, use_slab=use_slab)         # (T*W, Cout) f32
    h_ref[0] = h.reshape(T, W, Cout).astype(h_ref.dtype)

    # GroupNorm2 running statistics (on the f32 conv1 output).
    cs = jnp.sum(h, axis=0, keepdims=True)
    css = jnp.sum(h * h, axis=0, keepdims=True)
    gsum_ref[...] += jnp.dot(cs, c2g2_ref[...], preferred_element_type=jnp.float32)
    gssq_ref[...] += jnp.dot(css, c2g2_ref[...], preferred_element_type=jnp.float32)

    @pl.when(s == last)
    def _finalize():
        sc, sh = _finalize_gn(gsum_ref, gssq_ref, g2c2_ref, gamma2_ref, beta2_ref,
                              inv_count, eps)
        sc2_ref[0] = sc
        sh2_ref[0] = sh


# ----------------------------------------------------------------------------
# Pass 3: GN2-affine + conv2 (+ folded 1x1 projection / identity residual)
# ----------------------------------------------------------------------------

def _gn2_conv2_kernel(h_ref, ht_ref, hb_ref, sc2_ref, sh2_ref, x_ref,
                      w2_ref, b2_ref, out_ref, pad_ref, *, use_slab, has_proj):
    s = pl.program_id(1)
    last = pl.num_programs(1) - 1
    _, T, W, Cout = h_ref.shape
    Cin = x_ref.shape[3]

    @pl.when(s == 0)
    def _init():
        zcol = jnp.zeros((T + 2, 1, Cout), dtype=pad_ref.dtype)
        pad_ref[:, 0:1, :] = zcol
        pad_ref[:, W + 1:W + 2, :] = zcol

    scale = sc2_ref[0]                                               # (1, Cout)
    shift = sh2_ref[0]

    def gn(v):
        return (v * scale + shift).astype(pad_ref.dtype)

    body = gn(h_ref[0].astype(jnp.float32))
    top = gn(ht_ref[0].astype(jnp.float32))
    bot = gn(hb_ref[0].astype(jnp.float32))
    top = jnp.where(s > 0, top, jnp.zeros_like(top))
    bot = jnp.where(s < last, bot, jnp.zeros_like(bot))

    pad_ref[0:1, 1:W + 1, :] = top
    pad_ref[1:T + 1, 1:W + 1, :] = body
    pad_ref[T + 1:T + 2, 1:W + 1, :] = bot

    x = x_ref[0].reshape(T * W, Cin)                                 # residual source
    if has_proj:
        # 1x1 projection folded into the conv2 matmul as an extra tap (br in b2).
        acc = _conv3x3(pad_ref, w2_ref, b2_ref,
                       extra=x.astype(jnp.bfloat16), use_slab=use_slab)
    else:
        acc = _conv3x3(pad_ref, w2_ref, b2_ref, use_slab=use_slab) + x
    out_ref[0] = acc.reshape(T, W, Cout).astype(out_ref.dtype)


# ----------------------------------------------------------------------------
# Host-side helpers and wrappers
# ----------------------------------------------------------------------------

def _group_onehots(C, G):
    cg = C // G
    c2g = (jnp.arange(C)[:, None] // cg ==
           jnp.arange(G)[None, :]).astype(jnp.float32)               # (C, G)
    return c2g, c2g.T                                                # (C,G), (G,C)


def _im2col_weights(w_oihw):                                         # (O,I,3,3) -> (9I, O)
    o, i = w_oihw.shape[:2]
    return jnp.transpose(w_oihw, (2, 3, 1, 0)).reshape(9 * i, o).astype(jnp.bfloat16)


def _default_strip_rows(H, W, Cin, Cout, use_slab, budget_bytes):
    """Largest divisor of H (preferring multiples of 8, capped at 64) whose per-strip
    working set fits the VMEM budget.  Re-derive the budget per generation
    (<= ~48 MiB on v7x's 64 MiB/TC, larger on v5e/v6e's 128 MiB)."""
    C = max(Cin, Cout)

    def est(T):
        b = 2 * T * W * Cin * 4            # x strip blocks (double buffered)
        b += 2 * T * W * Cout * 2          # bf16 h strip blocks
        b += 2 * T * W * Cout * 4          # output strip blocks
        b += (T + 2) * (W + 2) * C * 2     # halo/pad scratch (bf16)
        b += T * W * Cout * 4              # conv accumulator
        if use_slab:
            b += T * W * (9 * C + Cin) * 2  # im2col slab (bf16)
        return b

    divisors = [d for d in range(1, H + 1) if H % d == 0]
    fitting = [d for d in divisors if est(d) <= budget_bytes]
    if not fitting:
        return divisors[0]
    pref = [d for d in fitting if d % 8 == 0 and d <= 64]
    if pref:
        return max(pref)
    small = [d for d in fitting if d <= 64]
    return max(small) if small else min(fitting)


def residual_block_forward_nhwc(x, params, num_groups, eps=1e-5, *,
                                strip_rows=None, vmem_limit_mb=48):
    """ResidualBlock forward in NHWC.  x: (N, H, W, Cin) -> (N, H, W, Cout)."""
    N, H, W, Cin = x.shape
    Cout = params["w1_oihw"].shape[0]
    G = num_groups
    assert Cin % G == 0 and Cout % G == 0, "channels must be divisible by num_groups"
    has_proj = params.get("wr_oihw", None) is not None

    # im2col slab only in the small-channel regime; per-tap matmuls for C >= 128.
    use_slab1 = Cin < 128
    use_slab2 = Cout < 128

    T = strip_rows if strip_rows is not None else _default_strip_rows(
        H, W, Cin, Cout, use_slab=(use_slab1 or use_slab2),
        budget_bytes=int(0.8 * vmem_limit_mb * (1 << 20)))
    assert H % T == 0, "strip_rows must divide H"
    S = H // T
    grid = (N, S)

    c2g1, g2c1 = _group_onehots(Cin, G)
    c2g2, g2c2 = _group_onehots(Cout, G)

    gamma1 = params["gn1_gamma"].reshape(1, Cin).astype(jnp.float32)
    beta1 = params["gn1_beta"].reshape(1, Cin).astype(jnp.float32)
    gamma2 = params["gn2_gamma"].reshape(1, Cout).astype(jnp.float32)
    beta2 = params["gn2_beta"].reshape(1, Cout).astype(jnp.float32)
    w1 = _im2col_weights(params["w1_oihw"])                          # (9*Cin, Cout)
    b1 = params["b1"].reshape(1, Cout).astype(jnp.float32)
    w2 = _im2col_weights(params["w2_oihw"])                          # (9*Cout, Cout)
    b2 = params["b2"].reshape(1, Cout).astype(jnp.float32)
    if has_proj:
        wr = params["wr_oihw"][:, :, 0, 0].T.astype(jnp.bfloat16)    # (Cin, Cout)
        w2 = jnp.concatenate([w2, wr], axis=0)                       # fold 1x1 proj
        b2 = b2 + params["br"].reshape(1, Cout).astype(jnp.float32)

    x = x.astype(jnp.float32)

    cparams = pltpu.CompilerParams(
        dimension_semantics=("parallel", "arbitrary"),
        vmem_limit_bytes=vmem_limit_mb << 20)

    body_map = lambda n, s: (n, s, 0, 0)
    top_map = lambda n, s: (n, jnp.maximum(s * T - 1, 0), 0, 0)      # prev strip's last row
    bot_map = lambda n, s: (n, jnp.minimum((s + 1) * T, H - 1), 0, 0)  # next strip's first row
    stat_map = lambda n, s: (n, 0, 0)
    par_map = lambda n, s: (0, 0)

    # ---- Pass 1: GN1 statistics ---------------------------------------------
    sc1, sh1 = pl.pallas_call(
        functools.partial(_gn_stats_kernel, eps=eps,
                          inv_count=1.0 / float(H * W * (Cin // G))),
        grid=grid,
        in_specs=[
            pl.BlockSpec((1, T, W, Cin), body_map),
            pl.BlockSpec((1, Cin), par_map),
            pl.BlockSpec((1, Cin), par_map),
            pl.BlockSpec((Cin, G), par_map),
            pl.BlockSpec((G, Cin), par_map),
        ],
        out_specs=[
            pl.BlockSpec((1, 1, Cin), stat_map),
            pl.BlockSpec((1, 1, Cin), stat_map),
        ],
        out_shape=[jax.ShapeDtypeStruct((N, 1, Cin), jnp.float32),
                   jax.ShapeDtypeStruct((N, 1, Cin), jnp.float32)],
        scratch_shapes=[pltpu.VMEM((1, G), jnp.float32),
                        pltpu.VMEM((1, G), jnp.float32)],
        compiler_params=cparams,
    )(x, gamma1, beta1, c2g1, g2c1)

    # ---- Pass 2: GN1 + ReLU + conv1, carry GN2 statistics -------------------
    h, sc2, sh2 = pl.pallas_call(
        functools.partial(_gn1_conv1_kernel, eps=eps,
                          inv_count=1.0 / float(H * W * (Cout // G)),
                          use_slab=use_slab1),
        grid=grid,
        in_specs=[
            pl.BlockSpec((1, T, W, Cin), body_map),
            pl.BlockSpec((1, 1, W, Cin), top_map),
            pl.BlockSpec((1, 1, W, Cin), bot_map),
            pl.BlockSpec((1, 1, Cin), stat_map),
            pl.BlockSpec((1, 1, Cin), stat_map),
            pl.BlockSpec(w1.shape, par_map),
            pl.BlockSpec((1, Cout), par_map),
            pl.BlockSpec((1, Cout), par_map),
            pl.BlockSpec((1, Cout), par_map),
            pl.BlockSpec((Cout, G), par_map),
            pl.BlockSpec((G, Cout), par_map),
        ],
        out_specs=[
            pl.BlockSpec((1, T, W, Cout), body_map),
            pl.BlockSpec((1, 1, Cout), stat_map),
            pl.BlockSpec((1, 1, Cout), stat_map),
        ],
        out_shape=[jax.ShapeDtypeStruct((N, H, W, Cout), jnp.bfloat16),
                   jax.ShapeDtypeStruct((N, 1, Cout), jnp.float32),
                   jax.ShapeDtypeStruct((N, 1, Cout), jnp.float32)],
        scratch_shapes=[pltpu.VMEM((T + 2, W + 2, Cin), jnp.bfloat16),
                        pltpu.VMEM((1, G), jnp.float32),
                        pltpu.VMEM((1, G), jnp.float32)],
        compiler_params=cparams,
    )(x, x, x, sc1, sh1, w1, b1, gamma2, beta2, c2g2, g2c2)

    # ---- Pass 3: GN2 + conv2 (+ folded projection / identity residual) ------
    out = pl.pallas_call(
        functools.partial(_gn2_conv2_kernel, use_slab=use_slab2, has_proj=has_proj),
        grid=grid,
        in_specs=[
            pl.BlockSpec((1, T, W, Cout), body_map),
            pl.BlockSpec((1, 1, W, Cout), top_map),
            pl.BlockSpec((1, 1, W, Cout), bot_map),
            pl.BlockSpec((1, 1, Cout), stat_map),
            pl.BlockSpec((1, 1, Cout), stat_map),
            pl.BlockSpec((1, T, W, Cin), body_map),
            pl.BlockSpec(w2.shape, par_map),
            pl.BlockSpec((1, Cout), par_map),
        ],
        out_specs=pl.BlockSpec((1, T, W, Cout), body_map),
        out_shape=jax.ShapeDtypeStruct((N, H, W, Cout), jnp.float32),
        scratch_shapes=[pltpu.VMEM((T + 2, W + 2, Cout), jnp.bfloat16)],
        compiler_params=cparams,
    )(h, h, h, sc2, sh2, x, w2, b2)

    return out


def residual_block_forward(x_nchw, params, num_groups, eps=1e-5, **kw):
    """PyTorch-parity wrapper (NCHW in / NCHW out).

    NOTE: these two transposes are full extra HBM round trips of the activation; an
    NHWC end-to-end model should call residual_block_forward_nhwc directly.
    """
    x = jnp.transpose(x_nchw, (0, 2, 3, 1))                          # NCHW -> NHWC
    y = residual_block_forward_nhwc(x, params, num_groups, eps, **kw)
    return jnp.transpose(y, (0, 3, 1, 2))                            # NHWC -> NCHW


# ----------------------------------------------------------------------------
# Pure-JAX reference (correctness check only)
# ----------------------------------------------------------------------------

def _ref_groupnorm(x, gamma, beta, G, eps=1e-5):
    N, C, H, W = x.shape
    xr = x.reshape(N, G, C // G, H, W)
    mean = xr.mean(axis=(2, 3, 4), keepdims=True)
    var = xr.var(axis=(2, 3, 4), keepdims=True)
    xn = ((xr - mean) / jnp.sqrt(var + eps)).reshape(N, C, H, W)
    return xn * gamma.reshape(1, C, 1, 1) + beta.reshape(1, C, 1, 1)


def _ref_conv(x, w_oihw, b, pad):
    y = jax.lax.conv_general_dilated(
        x, w_oihw, window_strides=(1, 1), padding=[(pad, pad), (pad, pad)],
        dimension_numbers=("NCHW", "OIHW", "NCHW"))
    return y + b.reshape(1, -1, 1, 1)


def _ref_forward(x, p, G):
    h = jnp.maximum(_ref_groupnorm(x, p["gn1_gamma"], p["gn1_beta"], G), 0.0)
    h = _ref_conv(h, p["w1_oihw"], p["b1"], 1)
    h = _ref_groupnorm(h, p["gn2_gamma"], p["gn2_beta"], G)
    h = _ref_conv(h, p["w2_oihw"], p["b2"], 1)
    if p.get("wr_oihw", None) is None:
        res = x
    else:
        res = _ref_conv(x, p["wr_oihw"], p["br"], 0)
    return h + res


# ----------------------------------------------------------------------------
# Main
# ----------------------------------------------------------------------------

if __name__ == "__main__":
    base_key = jax.random.PRNGKey(0)

    def make_params(key, Cin, Cout):
        ks = jax.random.split(key, 10)
        p = dict(
            gn1_gamma=1.0 + 0.1 * jax.random.normal(ks[0], (Cin,), jnp.float32),
            gn1_beta=0.1 * jax.random.normal(ks[1], (Cin,), jnp.float32),
            w1_oihw=0.1 * jax.random.normal(ks[2], (Cout, Cin, 3, 3), jnp.float32),
            b1=0.05 * jax.random.normal(ks[3], (Cout,), jnp.float32),
            gn2_gamma=1.0 + 0.1 * jax.random.normal(ks[4], (Cout,), jnp.float32),
            gn2_beta=0.1 * jax.random.normal(ks[5], (Cout,), jnp.float32),
            w2_oihw=0.1 * jax.random.normal(ks[6], (Cout, Cout, 3, 3), jnp.float32),
            b2=0.05 * jax.random.normal(ks[7], (Cout,), jnp.float32),
            wr_oihw=None, br=None,
        )
        if Cin != Cout:
            p["wr_oihw"] = 0.1 * jax.random.normal(ks[8], (Cout, Cin, 1, 1), jnp.float32)
            p["br"] = 0.05 * jax.random.normal(ks[9], (Cout,), jnp.float32)
        return p

    def run_case(case_key, N, Cin, Cout, H, W, G, strip_rows):
        kx, kp = jax.random.split(case_key)
        x = jax.random.normal(kx, (N, Cin, H, W), jnp.float32)
        params = make_params(kp, Cin, Cout)
        out = jax.block_until_ready(
            residual_block_forward(x, params, G, strip_rows=strip_rows))
        ref = jax.block_until_ready(_ref_forward(x, params, G))
        assert out.shape == (N, Cout, H, W)
        # Tolerance accounts for bf16 MXU inputs / bf16 intermediate (f32 accumulation).
        np.testing.assert_allclose(np.asarray(out), np.asarray(ref),
                                   rtol=2e-2, atol=1e-1)

    k1, k2 = jax.random.split(base_key)
    # Case 1: small channels -> im2col slab path + fused 1x1 projection,
    #         two row-strips per image (exercises GN stat carry + halo rows).
    run_case(k1, N=2, Cin=32, Cout=64, H=16, W=16, G=8, strip_rows=8)
    # Case 2: 128 channels (lane-dense) -> per-tap accumulation path + identity residual.
    run_case(k2, N=2, Cin=128, Cout=128, H=16, W=16, G=8, strip_rows=None)
    print("KERNEL_OK")
</pallas_src>

<mosaic_0001>
module attributes {stable_mosaic.version = 11 : i64} {
  func.func @_gn_stats_kernel(%arg0: i32, %arg1: i32, %arg2: memref<1x8x16x32xf32, #tpu.memory_space<vmem>>, %arg3: memref<1x32xf32, #tpu.memory_space<vmem>>, %arg4: memref<1x32xf32, #tpu.memory_space<vmem>>, %arg5: memref<32x8xf32, #tpu.memory_space<vmem>>, %arg6: memref<8x32xf32, #tpu.memory_space<vmem>>, %arg7: memref<1x1x32xf32, #tpu.memory_space<vmem>>, %arg8: memref<1x1x32xf32, #tpu.memory_space<vmem>>, %arg9: memref<1x8xf32, #tpu.memory_space<vmem>>, %arg10: memref<1x8xf32, #tpu.memory_space<vmem>>) attributes {dimension_semantics = [#tpu.dimension_semantics<parallel>, #tpu.dimension_semantics<arbitrary>], iteration_bounds = array<i64: 2, 2>, scalar_prefetch = 0 : i64, scratch_operands = 2 : i64, tpu.core_type = #tpu.core_type<tc>, window_params = [{transform_indices = @transform_0, window_bounds = array<i64: 1, 8, 16, 32>}, {pipeline_mode = #tpu.pipeline_mode<synchronous>, transform_indices = @transform_1, window_bounds = array<i64: 1, 32>}, {pipeline_mode = #tpu.pipeline_mode<synchronous>, transform_indices = @transform_2, window_bounds = array<i64: 1, 32>}, {pipeline_mode = #tpu.pipeline_mode<synchronous>, transform_indices = @transform_3, window_bounds = array<i64: 32, 8>}, {pipeline_mode = #tpu.pipeline_mode<synchronous>, transform_indices = @transform_4, window_bounds = array<i64: 8, 32>}, {transform_indices = @transform_5, window_bounds = array<i64: 1, 1, 32>}, {transform_indices = @transform_6, window_bounds = array<i64: 1, 1, 32>}]} {
    %c0_i32 = arith.constant 0 : i32
    %0 = arith.cmpi eq, %arg1, %c0_i32 : i32
    %1 = arith.extui %0 : i1 to i32
    %c0_i32_0 = arith.constant 0 : i32
    %2 = arith.cmpi ne, %1, %c0_i32_0 : i32
    scf.if %2 {
      %cst_20 = arith.constant 0.000000e+00 : f32
      %24 = vector.broadcast %cst_20 : f32 to vector<1x8xf32>
      %c0_21 = arith.constant 0 : index
      %c0_22 = arith.constant 0 : index
      %25 = vector.load %arg9[%c0_21, %c0_22] : memref<1x8xf32, #tpu.memory_space<vmem>>, vector<1x8xf32>
      tpu.vector_store %arg9[%c0_21, %c0_22], %24 {strides = array<i32>} : memref<1x8xf32, #tpu.memory_space<vmem>>, vector<1x8xf32>,
      %cst_23 = arith.constant 0.000000e+00 : f32
      %26 = vector.broadcast %cst_23 : f32 to vector<1x8xf32>
      %c0_24 = arith.constant 0 : index
      %c0_25 = arith.constant 0 : index
      %27 = vector.load %arg10[%c0_24, %c0_25] : memref<1x8xf32, #tpu.memory_space<vmem>>, vector<1x8xf32>
      tpu.vector_store %arg10[%c0_24, %c0_25], %26 {strides = array<i32>} : memref<1x8xf32, #tpu.memory_space<vmem>>, vector<1x8xf32>,
    } else {
    }
    %c0 = arith.constant 0 : index
    %c0_1 = arith.constant 0 : index
    %c0_2 = arith.constant 0 : index
    %c0_3 = arith.constant 0 : index
    %3 = vector.load %arg2[%c0, %c0_1, %c0_2, %c0_3] : memref<1x8x16x32xf32, #tpu.memory_space<vmem>>, vector<1x8x16x32xf32>
    %4 = vector.shape_cast %3 : vector<1x8x16x32xf32> to vector<8x16x32xf32>
    %5 = vector.shape_cast %4 : vector<8x16x32xf32> to vector<128x32xf32>
    %cst = arith.constant dense<0.000000e+00> : vector<32xf32>
    %6 = vector.multi_reduction <add>, %5, %cst [0] : vector<128x32xf32> to vector<32xf32>
    %7 = vector.shape_cast %6 : vector<32xf32> to vector<1x32xf32>
    %8 = arith.mulf %5, %5 : vector<128x32xf32>
    %cst_4 = arith.constant dense<0.000000e+00> : vector<32xf32>
    %9 = vector.multi_reduction <add>, %8, %cst_4 [0] : vector<128x32xf32> to vector<32xf32>
    %10 = vector.shape_cast %9 : vector<32xf32> to vector<1x32xf32>
    %c0_5 = arith.constant 0 : index
    %c0_6 = arith.constant 0 : index
    %11 = vector.load %arg9[%c0_5, %c0_6] : memref<1x8xf32, #tpu.memory_space<vmem>>, vector<1x8xf32>
    %c0_7 = arith.constant 0 : index
    %c0_8 = arith.constant 0 : index
    %12 = vector.load %arg5[%c0_7, %c0_8] : memref<32x8xf32, #tpu.memory_space<vmem>>, vector<32x8xf32>
    %cst_9 = arith.constant dense<0.000000e+00> : vector<1x8xf32>
    %13 = tpu.matmul %7, %12, %cst_9 {dimension_numbers = #tpu.dot_dimension_numbers<[1], [0], [0], [1], [0, 0, 1, 1], [], []>} : vector<1x32xf32>, vector<32x8xf32>, vector<1x8xf32> -> vector<1x8xf32>
    %14 = arith.addf %11, %13 : vector<1x8xf32>
    %c0_10 = arith.constant 0 : index
    %c0_11 = arith.constant 0 : index
    %15 = vector.load %arg9[%c0_10, %c0_11] : memref<1x8xf32, #tpu.memory_space<vmem>>, vector<1x8xf32>
    tpu.vector_store %arg9[%c0_10, %c0_11], %14 {strides = array<i32>} : memref<1x8xf32, #tpu.memory_space<vmem>>, vector<1x8xf32>,
    %c0_12 = arith.constant 0 : index
    %c0_13 = arith.constant 0 : index
    %16 = vector.load %arg10[%c0_12, %c0_13] : memref<1x8xf32, #tpu.memory_space<vmem>>, vector<1x8xf32>
    %c0_14 = arith.constant 0 : index
    %c0_15 = arith.constant 0 : index
    %17 = vector.load %arg5[%c0_14, %c0_15] : memref<32x8xf32, #tpu.memory_space<vmem>>, vector<32x8xf32>
    %cst_16 = arith.constant dense<0.000000e+00> : vector<1x8xf32>
    %18 = tpu.matmul %10, %17, %cst_16 {dimension_numbers = #tpu.dot_dimension_numbers<[1], [0], [0], [1], [0, 0, 1, 1], [], []>} : vector<1x32xf32>, vector<32x8xf32>, vector<1x8xf32> -> vector<1x8xf32>
    %19 = arith.addf %16, %18 : vector<1x8xf32>
    %c0_17 = arith.constant 0 : index
    %c0_18 = arith.constant 0 : index
    %20 = vector.load %arg10[%c0_17, %c0_18] : memref<1x8xf32, #tpu.memory_space<vmem>>, vector<1x8xf32>
    tpu.vector_store %arg10[%c0_17, %c0_18], %19 {strides = array<i32>} : memref<1x8xf32, #tpu.memory_space<vmem>>, vector<1x8xf32>,
    %c1_i32 = arith.constant 1 : i32
    %21 = arith.cmpi eq, %arg1, %c1_i32 : i32
    %22 = arith.extui %21 : i1 to i32
    %c0_i32_19 = arith.constant 0 : i32
    %23 = arith.cmpi ne, %22, %c0_i32_19 : i32
    scf.if %23 {
      %c0_20 = arith.constant 0 : index
      %c0_21 = arith.constant 0 : index
      %24 = vector.load %arg9[%c0_20, %c0_21] : memref<1x8xf32, #tpu.memory_space<vmem>>, vector<1x8xf32>
      %cst_22 = arith.constant 9.765625E-4 : f32
      %25 = vector.broadcast %cst_22 : f32 to vector<1x8xf32>
      %26 = arith.mulf %24, %25 : vector<1x8xf32>
      %c0_23 = arith.constant 0 : index
      %c0_24 = arith.constant 0 : index
      %27 = vector.load %arg10[%c0_23, %c0_24] : memref<1x8xf32, #tpu.memory_space<vmem>>, vector<1x8xf32>
      %cst_25 = arith.constant 9.765625E-4 : f32
      %28 = vector.broadcast %cst_25 : f32 to vector<1x8xf32>
      %29 = arith.mulf %27, %28 : vector<1x8xf32>
      %30 = arith.mulf %26, %26 : vector<1x8xf32>
      %31 = arith.subf %29, %30 : vector<1x8xf32>
      %cst_26 = arith.constant 9.99999974E-6 : f32
      %32 = vector.broadcast %cst_26 : f32 to vector<1x8xf32>
      %33 = arith.addf %31, %32 : vector<1x8xf32>
      %34 = math.rsqrt %33 : vector<1x8xf32>
      %c0_27 = arith.constant 0 : index
      %c0_28 = arith.constant 0 : index
      %35 = vector.load %arg6[%c0_27, %c0_28] : memref<8x32xf32, #tpu.memory_space<vmem>>, vector<8x32xf32>
      %cst_29 = arith.constant dense<0.000000e+00> : vector<1x32xf32>
      %36 = tpu.matmul %26, %35, %cst_29 {dimension_numbers = #tpu.dot_dimension_numbers<[1], [0], [0], [1], [0, 0, 1, 1], [], []>} : vector<1x8xf32>, vector<8x32xf32>, vector<1x32xf32> -> vector<1x32xf32>
      %c0_30 = arith.constant 0 : index
      %c0_31 = arith.constant 0 : index
      %37 = vector.load %arg6[%c0_30, %c0_31] : memref<8x32xf32, #tpu.memory_space<vmem>>, vector<8x32xf32>
      %cst_32 = arith.constant dense<0.000000e+00> : vector<1x32xf32>
      %38 = tpu.matmul %34, %37, %cst_32 {dimension_numbers = #tpu.dot_dimension_numbers<[1], [0], [0], [1], [0, 0, 1, 1], [], []>} : vector<1x8xf32>, vector<8x32xf32>, vector<1x32xf32> -> vector<1x32xf32>
      %c0_33 = arith.constant 0 : index
      %c0_34 = arith.constant 0 : index
      %39 = vector.load %arg3[%c0_33, %c0_34] : memref<1x32xf32, #tpu.memory_space<vmem>>, vector<1x32xf32>
      %40 = arith.mulf %39, %38 : vector<1x32xf32>
      %c0_35 = arith.constant 0 : index
      %c0_36 = arith.constant 0 : index
      %41 = vector.load %arg4[%c0_35, %c0_36] : memref<1x32xf32, #tpu.memory_space<vmem>>, vector<1x32xf32>
      %42 = arith.mulf %36, %40 : vector<1x32xf32>
      %43 = arith.subf %41, %42 : vector<1x32xf32>
      %c0_37 = arith.constant 0 : index
      %c0_38 = arith.constant 0 : index
      %c0_39 = arith.constant 0 : index
      %44 = vector.load %arg7[%c0_37, %c0_38, %c0_39] : memref<1x1x32xf32, #tpu.memory_space<vmem>>, vector<1x1x32xf32>
      %45 = vector.shape_cast %44 : vector<1x1x32xf32> to vector<1x32xf32>
      %46 = vector.shape_cast %40 : vector<1x32xf32> to vector<1x1x32xf32>
      tpu.vector_store %arg7[%c0_37, %c0_38, %c0_39], %46 {strides = array<i32>} : memref<1x1x32xf32, #tpu.memory_space<vmem>>, vector<1x1x32xf32>,
      %c0_40 = arith.constant 0 : index
      %c0_41 = arith.constant 0 : index
      %c0_42 = arith.constant 0 : index
      %47 = vector.load %arg8[%c0_40, %c0_41, %c0_42] : memref<1x1x32xf32, #tpu.memory_space<vmem>>, vector<1x1x32xf32>
      %48 = vector.shape_cast %47 : vector<1x1x32xf32> to vector<1x32xf32>
      %49 = vector.shape_cast %43 : vector<1x32xf32> to vector<1x1x32xf32>
      tpu.vector_store %arg8[%c0_40, %c0_41, %c0_42], %49 {strides = array<i32>} : memref<1x1x32xf32, #tpu.memory_space<vmem>>, vector<1x1x32xf32>,
    } else {
    }
    return
  }
  func.func @transform_0(%arg0: i32, %arg1: i32) -> (i32, i32, i32, i32) {
    %c0_i32 = arith.constant 0 : i32
    %c0_i32_0 = arith.constant 0 : i32
    %c0_i32_1 = arith.constant 0 : i32
    return %arg0, %arg1, %c0_i32, %c0_i32_0 : i32, i32, i32, i32
  }
  func.func @transform_1(%arg0: i32, %arg1: i32) -> (i32, i32) {
    %c0_i32 = arith.constant 0 : i32
    %c0_i32_0 = arith.constant 0 : i32
    %c0_i32_1 = arith.constant 0 : i32
    return %c0_i32, %c0_i32_0 : i32, i32
  }
  func.func @transform_2(%arg0: i32, %arg1: i32) -> (i32, i32) {
    %c0_i32 = arith.constant 0 : i32
    %c0_i32_0 = arith.constant 0 : i32
    %c0_i32_1 = arith.constant 0 : i32
    return %c0_i32, %c0_i32_0 : i32, i32
  }
  func.func @transform_3(%arg0: i32, %arg1: i32) -> (i32, i32) {
    %c0_i32 = arith.constant 0 : i32
    %c0_i32_0 = arith.constant 0 : i32
    %c0_i32_1 = arith.constant 0 : i32
    return %c0_i32, %c0_i32_0 : i32, i32
  }
  func.func @transform_4(%arg0: i32, %arg1: i32) -> (i32, i32) {
    %c0_i32 = arith.constant 0 : i32
    %c0_i32_0 = arith.constant 0 : i32
    %c0_i32_1 = arith.constant 0 : i32
    return %c0_i32, %c0_i32_0 : i32, i32
  }
  func.func @transform_5(%arg0: i32, %arg1: i32) -> (i32, i32, i32) {
    %c0_i32 = arith.constant 0 : i32
    %c0_i32_0 = arith.constant 0 : i32
    %c0_i32_1 = arith.constant 0 : i32
    return %arg0, %c0_i32, %c0_i32_0 : i32, i32, i32
  }
  func.func @transform_6(%arg0: i32, %arg1: i32) -> (i32, i32, i32) {
    %c0_i32 = arith.constant 0 : i32
    %c0_i32_0 = arith.constant 0 : i32
    %c0_i32_1 = arith.constant 0 : i32
    return %arg0, %c0_i32, %c0_i32_0 : i32, i32, i32
  }
}

</mosaic_0001>

<llo_original>
// kernel: tpu_custom_call.1
$region0: #{tpu_custom_call.1}
  #allocation0 [shape = 'u32[]', space=smem, size = 0x4, offset = 0x4, fixed_abs, tag = 'smem constant byte address 0x4 - core index']
  #allocation1 [shape = 'u32[144,128]{1,0:T(1,128)}', space=vmem, size = 0x12000, scoped, tag = 'internal scratch']
  #allocation2 [shape = 'f32[1,8]{1,0:T(1,128)}', space=vmem, size = 0x200, scoped, tag = 'scratch operand']
  #allocation3 [shape = 'f32[1,8]{1,0:T(1,128)}', space=vmem, size = 0x200, scoped, tag = 'scratch operand']
  %s0 = inlined_call_operand.hbm [shape: f32[2,16,16,32], index: 0, kind: input, shape index: {}]
  %s1 = inlined_call_operand.vmem [shape: f32[1,32], index: 1, kind: input, shape index: {}]
  %s2 = inlined_call_operand.vmem [shape: f32[1,32], index: 2, kind: input, shape index: {}]
  %s3 = inlined_call_operand.vmem [shape: f32[32,8], index: 3, kind: input, shape index: {}]
  %s4 = inlined_call_operand.vmem [shape: f32[8,32], index: 4, kind: input, shape index: {}]
  %s5 = inlined_call_operand.hbm [shape: f32[2,1,32], index: 5, kind: output, shape index: {0}]
  %s6 = inlined_call_operand.hbm [shape: f32[2,1,32], index: 6, kind: output, shape index: {1}]
  %7 = xla_tuple %s5, %s6
  %s8 = sld [smem:[#allocation0]]
  $region73: #{tpu_custom_call.1} parent=0
    _
  %s10 = ssub.s32 1, %s8
  %s11 = scalar_select 0, %s10, %s8
  $region1: #{tpu_custom_call.1} parent=0
    #allocation4 [shape = 'u8[131072]{0}', space=vmem, size = 0x20000, scoped, tag = 'input window, operand 0']
    #allocation5 [shape = 's32[2]{0}', space=sflag, size = 0x8, scoped, tag = 'scoped memory for tpu_custom_call.1']
    #allocation6 [shape = 's32[2]{0}', space=sflag, size = 0x8, scoped, tag = 'scoped memory for tpu_custom_call.1']
    #allocation7 [shape = 'u8[1024]{0}', space=vmem, size = 0x400, scoped, tag = 'output window, operand 0']
    #allocation8 [shape = 'u8[1024]{0}', space=vmem, size = 0x400, scoped, tag = 'output window, operand 1']
    #allocation9 [shape = 's32[2]{0}', space=sflag, size = 0x8, scoped, tag = 'scoped memory for tpu_custom_call.1']
    %12 = vsyncpa [#allocation5], 0
    %s13 = scalar_lea.sflag [#allocation5], 1
    %14 = vsyncpa %s13, 0
    %15 = vsyncpa [#allocation6], 0
    %s16 = scalar_lea.sflag [#allocation6], 1
    %17 = vsyncpa %s16, 0
    %18 = vsyncpa [#allocation9], 0
    %s19 = scalar_lea.sflag [#allocation9], 1
    %20 = vsyncpa %s19, 0
    loop: start=0, step=1, limit=6
    $region2: #{tpu_custom_call.1} parent=1 // loop_pre_header
      _
    $region3: #{tpu_custom_call.1} parent=1 // loop_header
      %s22 = sphi 0, %s26
      %p23 = scmp.ge.s32.totalorder %s22, 6
      %s29 = sphi 0, %s41
      %s30 = sphi 0, %s37
      %s31 = sphi 0, %s29
      %s32 = sphi 0, %s30
      %s33 = sphi 0, %s31
      %s34 = sphi 0, %s32
      %s46 = sphi 0, %s48
      %s49 = sphi 0, %s46
      %s50 = sphi 0, %s49
      %s66 = sphi 0, %s50
      %s70 = sphi 0, %s70
      %s72 = sphi 0, %s70
      %s73 = sphi 0, %s72
      %s87 = sphi 0, %s73
      %s91 = sphi 0, %s91
      %s93 = sphi 0, %s91
      %s94 = sphi 0, %s93
      %s108 = sphi 0, %s94
      %s112 = sphi 0, %s112
      %s114 = sphi 0, %s112
      %s115 = sphi 0, %s114
      %s129 = sphi 0, %s115
      %s133 = sphi 0, %s133
      %s135 = sphi 0, %s133
      %s136 = sphi 0, %s135
      %s150 = sphi 0, %s136
      %s156 = sphi 0, %s158
      %s159 = sphi 0, %s156
      %s160 = sphi 0, %s159
      %s176 = sphi 0, %s160
      %s182 = sphi 0, %s184
      %s185 = sphi 0, %s182
      %s186 = sphi 0, %s185
      %s202 = sphi 0, %s186
    $region4: #{tpu_custom_call.1} parent=1 // loop_header_branch
      %25 = sbr.rel (%p23) target = $region8
    $region5: #{tpu_custom_call.1} parent=1 // loop_body
      %s27 = ssub.s32 %s22, 1
      %s28 = ssub.s32 %s22, 2
      %s35 = sadd.s32 1, %s30
      %p36 = scmp.ge.s32.totalorder %s35, 2
      %s37 = scalar_select %p36, 0, %s35
      %s38 = sadd.s32 1, %s29
      %s39 = scalar_select %p36, %s38, %s29
      %p40 = scmp.ge.s32.totalorder %s39, 2
      %s41 = scalar_select %p40, 0, %s39
      %s42 = ssub.s32 %s29, %s41
      %s43 = ssub.s32 %s30, %s37
      %s44 = sor.u32 %s42, %s43
      %p45 = scmp.eq.s32.totalorder %s44, 0
      %s47 = sadd.s32 %s46, 1
      %s48 = scalar_select %p45, %s46, %s47
      %p51 = pneg %p45
      %p52 = scmp.eq.s32.totalorder %s22, 3
      %p53 = por %p51, %p52
      %p54 = scmp.ne.s32.totalorder %s46, %s49
      %p55 = scmp.eq.s32.totalorder %s22, 0
      %p56 = por %p54, %p55
      %p57 = scmp.ne.s32.totalorder %s46, %s49
      %p58 = scmp.eq.s32.totalorder %s27, 3
      %p59 = por %p57, %p58
      %p60 = scmp.ne.s32.totalorder %s49, %s50
      %p61 = scmp.eq.s32.totalorder %s27, 0
      %p62 = por %p60, %p61
      %p63 = scmp.ne.s32.totalorder %s49, %s50
      %p64 = scmp.eq.s32.totalorder %s28, 3
      %p65 = por %p63, %p64
      %p67 = scmp.ne.s32.totalorder %s50, %s66
      %p68 = scmp.eq.s32.totalorder %s28, 0
      %p69 = por %p67, %p68
      %s71 = sadd.s32 %s70, 1
      %p74 = scmp.eq.s32.totalorder %s22, 3
      %p75 = scmp.ne.s32.totalorder %s70, %s72
      %p76 = scmp.eq.s32.totalorder %s22, 0
      %p77 = por %p75, %p76
      %p78 = scmp.ne.s32.totalorder %s70, %s72
      %p79 = scmp.eq.s32.totalorder %s27, 3
      %p80 = por %p78, %p79
      %p81 = scmp.ne.s32.totalorder %s72, %s73
      %p82 = scmp.eq.s32.totalorder %s27, 0
      %p83 = por %p81, %p82
      %p84 = scmp.ne.s32.totalorder %s72, %s73
      %p85 = scmp.eq.s32.totalorder %s28, 3
      %p86 = por %p84, %p85
      %p88 = scmp.ne.s32.totalorder %s73, %s87
      %p89 = scmp.eq.s32.totalorder %s28, 0
      %p90 = por %p88, %p89
      %s92 = sadd.s32 %s91, 1
      %p95 = scmp.eq.s32.totalorder %s22, 3
      %p96 = scmp.ne.s32.totalorder %s91, %s93
      %p97 = scmp.eq.s32.totalorder %s22, 0
      %p98 = por %p96, %p97
      %p99 = scmp.ne.s32.totalorder %s91, %s93
      %p100 = scmp.eq.s32.totalorder %s27, 3
      %p101 = por %p99, %p100
      %p102 = scmp.ne.s32.totalorder %s93, %s94
      %p103 = scmp.eq.s32.totalorder %s27, 0
      %p104 = por %p102, %p103
      %p105 = scmp.ne.s32.totalorder %s93, %s94
      %p106 = scmp.eq.s32.totalorder %s28, 3
      %p107 = por %p105, %p106
      %p109 = scmp.ne.s32.totalorder %s94, %s108
      %p110 = scmp.eq.s32.totalorder %s28, 0
      %p111 = por %p109, %p110
      %s113 = sadd.s32 %s112, 1
      %p116 = scmp.eq.s32.totalorder %s22, 3
      %p117 = scmp.ne.s32.totalorder %s112, %s114
      %p118 = scmp.eq.s32.totalorder %s22, 0
      %p119 = por %p117, %p118
      %p120 = scmp.ne.s32.totalorder %s112, %s114
      %p121 = scmp.eq.s32.totalorder %s27, 3
      %p122 = por %p120, %p121
      %p123 = scmp.ne.s32.totalorder %s114, %s115
      %p124 = scmp.eq.s32.totalorder %s27, 0
      %p125 = por %p123, %p124
      %p126 = scmp.ne.s32.totalorder %s114, %s115
      %p127 = scmp.eq.s32.totalorder %s28, 3
      %p128 = por %p126, %p127
      %p130 = scmp.ne.s32.totalorder %s115, %s129
      %p131 = scmp.eq.s32.totalorder %s28, 0
      %p132 = por %p130, %p131
      %s134 = sadd.s32 %s133, 1
      %p137 = scmp.eq.s32.totalorder %s22, 3
      %p138 = scmp.ne.s32.totalorder %s133, %s135
      %p139 = scmp.eq.s32.totalorder %s22, 0
      %p140 = por %p138, %p139
      %p141 = scmp.ne.s32.totalorder %s133, %s135
      %p142 = scmp.eq.s32.totalorder %s27, 3
      %p143 = por %p141, %p142
      %p144 = scmp.ne.s32.totalorder %s135, %s136
      %p145 = scmp.eq.s32.totalorder %s27, 0
      %p146 = por %p144, %p145
      %p147 = scmp.ne.s32.totalorder %s135, %s136
      %p148 = scmp.eq.s32.totalorder %s28, 3
      %p149 = por %p147, %p148
      %p151 = scmp.ne.s32.totalorder %s136, %s150
      %p152 = scmp.eq.s32.totalorder %s28, 0
      %p153 = por %p151, %p152
      %s154 = ssub.s32 %s29, %s41
      %p155 = scmp.eq.s32.totalorder %s154, 0
      %s157 = sadd.s32 %s156, 1
      %s158 = scalar_select %p155, %s156, %s157
      %p161 = pneg %p155
      %p162 = scmp.eq.s32.totalorder %s22, 3
      %p163 = por %p161, %p162
      %p164 = scmp.ne.s32.totalorder %s156, %s159
      %p165 = scmp.eq.s32.totalorder %s22, 0
      %p166 = por %p164, %p165
      %p167 = scmp.ne.s32.totalorder %s156, %s159
      %p168 = scmp.eq.s32.totalorder %s27, 3
      %p169 = por %p167, %p168
      %p170 = scmp.ne.s32.totalorder %s159, %s160
      %p171 = scmp.eq.s32.totalorder %s27, 0
      %p172 = por %p170, %p171
      %p173 = scmp.ne.s32.totalorder %s159, %s160
      %p174 = scmp.eq.s32.totalorder %s28, 3
      %p175 = por %p173, %p174
      %p177 = scmp.ne.s32.totalorder %s160, %s176
      %p178 = scmp.eq.s32.totalorder %s28, 0
      %p179 = por %p177, %p178
      %s180 = ssub.s32 %s29, %s41
      %p181 = scmp.eq.s32.totalorder %s180, 0
      %s183 = sadd.s32 %s182, 1
      %s184 = scalar_select %p181, %s182, %s183
      %p187 = pneg %p181
      %p188 = scmp.eq.s32.totalorder %s22, 3
      %p189 = por %p187, %p188
      %p190 = scmp.ne.s32.totalorder %s182, %s185
      %p191 = scmp.eq.s32.totalorder %s22, 0
      %p192 = por %p190, %p191
      %p193 = scmp.ne.s32.totalorder %s182, %s185
      %p194 = scmp.eq.s32.totalorder %s27, 3
      %p195 = por %p193, %p194
      %p196 = scmp.ne.s32.totalorder %s185, %s186
      %p197 = scmp.eq.s32.totalorder %s27, 0
      %p198 = por %p196, %p197
      %p199 = scmp.ne.s32.totalorder %s185, %s186
      %p200 = scmp.eq.s32.totalorder %s28, 3
      %p201 = por %p199, %p200
      %p203 = scmp.ne.s32.totalorder %s186, %s202
      %p204 = scmp.eq.s32.totalorder %s28, 0
      %p205 = por %p203, %p204
      %p206 = scmp.le.s32.totalorder 1, %s22
      %p207 = scmp.lt.s32.totalorder %s22, 5
      %p208 = pnand %p206, %p207
      %p209 = pneg %p208
      // Predicated region
      $region9: #{tpu_custom_call.1} parent=5 // pred_check
        _
      $region10: #{tpu_custom_call.1} parent=5 // pred_check_branch
        %211 = sbr.rel (%p208) target = $region12
      $region11: #{tpu_custom_call.1} parent=5 // pred_region
        %s212 = ssub.s32 %s22, 1
        // Predicated region
        $region13: #{tpu_custom_call.1} parent=11 // pred_check
          %p213 = pneg %p83
        $region14: #{tpu_custom_call.1} parent=11 // pred_check_branch
          %215 = sbr.rel (%p213) target = $region16
        $region15: #{tpu_custom_call.1} parent=11 // pred_region
          _
        $region16: #{tpu_custom_call.1} parent=11 // pred_fallthru
          _
        // Predicated region
        $region17: #{tpu_custom_call.1} parent=11 // pred_check
          %p216 = pneg %p104
        $region18: #{tpu_custom_call.1} parent=11 // pred_check_branch
          %218 = sbr.rel (%p216) target = $region20
        $region19: #{tpu_custom_call.1} parent=11 // pred_region
          _
        $region20: #{tpu_custom_call.1} parent=11 // pred_fallthru
          _
        // Predicated region
        $region21: #{tpu_custom_call.1} parent=11 // pred_check
          %p219 = pneg %p125
        $region22: #{tpu_custom_call.1} parent=11 // pred_check_branch
          %221 = sbr.rel (%p219) target = $region24
        $region23: #{tpu_custom_call.1} parent=11 // pred_region
          _
        $region24: #{tpu_custom_call.1} parent=11 // pred_fallthru
          _
        // Predicated region
        $region25: #{tpu_custom_call.1} parent=11 // pred_check
          %p222 = pneg %p146
        $region26: #{tpu_custom_call.1} parent=11 // pred_check_branch
          %224 = sbr.rel (%p222) target = $region28
        $region27: #{tpu_custom_call.1} parent=11 // pred_region
          _
        $region28: #{tpu_custom_call.1} parent=11 // pred_fallthru
          _
      $region12: #{tpu_custom_call.1} parent=5 // pred_fallthru
        _
      %p225 = scmp.lt.s32.totalorder %s22, 4
      // Predicated region
      $region29: #{tpu_custom_call.1} parent=5 // pred_check
        %p226 = pneg %p225
      $region30: #{tpu_custom_call.1} parent=5 // pred_check_branch
        %228 = sbr.rel (%p226) target = $region32
      $region31: #{tpu_custom_call.1} parent=5 // pred_region
        // Predicated region
        $region33: #{tpu_custom_call.1} parent=31 // pred_check
          %p229 = pneg %p56
        $region34: #{tpu_custom_call.1} parent=31 // pred_check_branch
          %231 = sbr.rel (%p229) target = $region36
        $region35: #{tpu_custom_call.1} parent=31 // pred_region
          %s232 = sand.u32 %s46, 1
          %s233 = scalar_lea.sflag [#allocation5], %s232
          %s234 = sand.u32 %s46, 1
          %s235 = smul.addr %s234, 128
          %s236 = scalar_lea.vmem [#allocation4], %s235
          %s237 = smul.u32 8, %s30
          %s239 = ssub.s32 2048, 2048
          %240 = vsyncadd %s233, %s239
          %s241 = smul.addr %s237, 2
          %s242 = smul.addr %s29, 32
          %s243 = sadd.s32 %s241, %s242
          %s244 = smul.addr %s243, 128
          %s245 = scalar_lea.hbm %s0, %s244
          %s246 = sshll.u32 %s236, 4
          %s247 = int_to_ptr.vmem [resolvable:$true] %s246
          %252 = dma.hbm_to_vmem [thread:$0]  %s245, 2048, %s247, %s233, 128, 128, 8
        $region36: #{tpu_custom_call.1} parent=31 // pred_fallthru
          _
      $region32: #{tpu_custom_call.1} parent=5 // pred_fallthru
        _
      %p253 = scmp.le.s32.totalorder 1, %s22
      %p254 = scmp.lt.s32.totalorder %s22, 5
      %p255 = pnand %p253, %p254
      %p256 = pneg %p255
      // Predicated region
      $region37: #{tpu_custom_call.1} parent=5 // pred_check
        _
      $region38: #{tpu_custom_call.1} parent=5 // pred_check_branch
        %258 = sbr.rel (%p255) target = $region40
      $region39: #{tpu_custom_call.1} parent=5 // pred_region
        %s259 = ssub.s32 %s22, 1
        %s260 = sand.u32 %s49, 1
        %s261 = scalar_lea.sflag [#allocation5], %s260
        %s262 = sand.u32 %s49, 1
        %s263 = smul.addr %s262, 128
        %s264 = scalar_lea.vmem [#allocation4], %s263
        // Predicated region
        $region41: #{tpu_custom_call.1} parent=39 // pred_check
          %p265 = pneg %p62
        $region42: #{tpu_custom_call.1} parent=39 // pred_check_branch
          %267 = sbr.rel (%p265) target = $region44
        $region43: #{tpu_custom_call.1} parent=39 // pred_region
          %268 = dma.done %s261, 2048
        $region44: #{tpu_custom_call.1} parent=39 // pred_fallthru
          _
        %s269 = sand.u32 %s49, 1
        %s270 = scalar_lea.sflag [#allocation5], %s269
        %s271 = sand.u32 %s49, 1
        %s272 = smul.addr %s271, 128
        %s273 = scalar_lea.vmem [#allocation4], %s272
        %p274 = pneg %p62
        %p275 = pneg %p59
        %p276 = pneg %p83
        %p277 = pneg %p80
        %p278 = pneg %p104
        %p279 = pneg %p101
        %p280 = pneg %p125
        %p281 = pneg %p122
        %p282 = pneg %p146
        %p283 = pneg %p143
        %p284 = pneg %p172
        %p285 = pneg %p169
        %s286 = sand.u32 %s159, 1
        %s287 = scalar_lea.sflag [#allocation6], %s286
        %s288 = sand.u32 %s159, 1
        %s289 = scalar_lea.vmem [#allocation7], %s288
        %p290 = pneg %p198
        %p291 = pneg %p195
        %s292 = sand.u32 %s185, 1
        %s293 = scalar_lea.sflag [#allocation9], %s292
        %s294 = sand.u32 %s185, 1
        %s295 = scalar_lea.vmem [#allocation8], %s294
        %s296 = smul.u32 8, %s32
        %p297 = scmp.eq.s32.totalorder %s32, 0
        // Predicated region
        $region45: #{tpu_custom_call.1} parent=39 // pred_check
          %p298 = pneg %p297
        $region46: #{tpu_custom_call.1} parent=39 // pred_check_branch
          %300 = sbr.rel (%p298) target = $region48
        $region47: #{tpu_custom_call.1} parent=39 // pred_region
          %vm301 = vcmask 57344
          %302 = vst.msk [vmem:[#allocation2] sm:$0x1] %vm301, 0.0
          %303 = vst.msk [vmem:[#allocation3] sm:$0x1] %vm301, 0.0
        $region48: #{tpu_custom_call.1} parent=39 // pred_fallthru
          _
        %v304 = vld [vmem:[%s264] sm:$0xff]
        %v305 = vld [vmem:[%s264 + $0x8] sm:$0xff]
        %v306 = vld [vmem:[%s264 + $0x10] sm:$0xff]
        %v307 = vld [vmem:[%s264 + $0x18] sm:$0xff]
        %v308 = vld [vmem:[%s264 + $0x20] sm:$0xff]
        %v309 = vld [vmem:[%s264 + $0x28] sm:$0xff]
        %v310 = vld [vmem:[%s264 + $0x30] sm:$0xff]
        %v311 = vld [vmem:[%s264 + $0x38] sm:$0xff]
        %v312 = vld [vmem:[%s264 + $0x40] sm:$0xff]
        %v313 = vld [vmem:[%s264 + $0x48] sm:$0xff]
        %v314 = vld [vmem:[%s264 + $0x50] sm:$0xff]
        %v315 = vld [vmem:[%s264 + $0x58] sm:$0xff]
        %v316 = vld [vmem:[%s264 + $0x60] sm:$0xff]
        %v317 = vld [vmem:[%s264 + $0x68] sm:$0xff]
        %v318 = vld [vmem:[%s264 + $0x70] sm:$0xff]
        %v319 = vld [vmem:[%s264 + $0x78] sm:$0xff]
        %vm320 = vcmask 261120
        %v321 = vsel %vm320, %v304, 0.0
        %v322 = vsel %vm320, %v305, 0.0
        %v323 = vadd.f32 %v321, %v322
        %v324 = vsel %vm320, %v306, 0.0
        %v325 = vadd.f32 %v323, %v324
        %v326 = vsel %vm320, %v307, 0.0
        %v327 = vadd.f32 %v325, %v326
        %v328 = vsel %vm320, %v308, 0.0
        %v329 = vadd.f32 %v327, %v328
        %v330 = vsel %vm320, %v309, 0.0
        %v331 = vadd.f32 %v329, %v330
        %v332 = vsel %vm320, %v310, 0.0
        %v333 = vadd.f32 %v331, %v332
        %v334 = vsel %vm320, %v311, 0.0
        %v335 = vadd.f32 %v333, %v334
        %v336 = vsel %vm320, %v312, 0.0
        %v337 = vadd.f32 %v335, %v336
        %v338 = vsel %vm320, %v313, 0.0
        %v339 = vadd.f32 %v337, %v338
        %v340 = vsel %vm320, %v314, 0.0
        %v341 = vadd.f32 %v339, %v340
        %v342 = vsel %vm320, %v315, 0.0
        %v343 = vadd.f32 %v341, %v342
        %v344 = vsel %vm320, %v316, 0.0
        %v345 = vadd.f32 %v343, %v344
        %v346 = vsel %vm320, %v317, 0.0
        %v347 = vadd.f32 %v345, %v346
        %v348 = vsel %vm320, %v318, 0.0
        %v349 = vadd.f32 %v347, %v348
        %v350 = vsel %vm320, %v319, 0.0
        %v351 = vadd.f32 %v349, %v350
        %v352 = vrot.slane %v351, 4
        %v353 = vadd.f32 %v351, %v352
        %v354 = vrot.slane %v353, 2
        %v355 = vadd.f32 %v353, %v354
        %v356 = vrot.slane %v355, 1
        %v357 = vadd.f32 %v355, %v356
        %v358 = vmul.f32 %v304, %v304
        %v359 = vmul.f32 %v305, %v305
        %v360 = vmul.f32 %v306, %v306
        %v361 = vmul.f32 %v307, %v307
        %v362 = vmul.f32 %v308, %v308
        %v363 = vmul.f32 %v309, %v309
        %v364 = vmul.f32 %v310, %v310
        %v365 = vmul.f32 %v311, %v311
        %v366 = vmul.f32 %v312, %v312
        %v367 = vmul.f32 %v313, %v313
        %v368 = vmul.f32 %v314, %v314
        %v369 = vmul.f32 %v315, %v315
        %v370 = vmul.f32 %v316, %v316
        %v371 = vmul.f32 %v317, %v317
        %v372 = vmul.f32 %v318, %v318
        %v373 = vmul.f32 %v319, %v319
        %v374 = vsel %vm320, %v358, 0.0
        %v375 = vsel %vm320, %v359, 0.0
        %v376 = vadd.f32 %v374, %v375
        %v377 = vsel %vm320, %v360, 0.0
        %v378 = vadd.f32 %v376, %v377
        %v379 = vsel %vm320, %v361, 0.0
        %v380 = vadd.f32 %v378, %v379
        %v381 = vsel %vm320, %v362, 0.0
        %v382 = vadd.f32 %v380, %v381
        %v383 = vsel %vm320, %v363, 0.0
        %v384 = vadd.f32 %v382, %v383
        %v385 = vsel %vm320, %v364, 0.0
        %v386 = vadd.f32 %v384, %v385
        %v387 = vsel %vm320, %v365, 0.0
        %v388 = vadd.f32 %v386, %v387
        %v389 = vsel %vm320, %v366, 0.0
        %v390 = vadd.f32 %v388, %v389
        %v391 = vsel %vm320, %v367, 0.0
        %v392 = vadd.f32 %v390, %v391
        %v393 = vsel %vm320, %v368, 0.0
        %v394 = vadd.f32 %v392, %v393
        %v395 = vsel %vm320, %v369, 0.0
        %v396 = vadd.f32 %v394, %v395
        %v397 = vsel %vm320, %v370, 0.0
        %v398 = vadd.f32 %v396, %v397
        %v399 = vsel %vm320, %v371, 0.0
        %v400 = vadd.f32 %v398, %v399
        %v401 = vsel %vm320, %v372, 0.0
        %v402 = vadd.f32 %v400, %v401
        %v403 = vsel %vm320, %v373, 0.0
        %v404 = vadd.f32 %v402, %v403
        %v405 = vrot.slane %v404, 4
        %v406 = vadd.f32 %v404, %v405
        %v407 = vrot.slane %v406, 2
        %v408 = vadd.f32 %v406, %v407
        %v409 = vrot.slane %v408, 1
        %v410 = vadd.f32 %v408, %v409
        %v411 = vld [vmem:[#allocation2] sm:$0x1]
        %v412 = vld [vmem:[%s3] sm:$0xff]
        %v413 = vld [vmem:[%s3 + $0x8] sm:$0xff]
        %v414 = vld [vmem:[%s3 + $0x10] sm:$0xff]
        %v415 = vld [vmem:[%s3 + $0x18] sm:$0xff]
        %v417 = vsel %vm320, %v357, 0
        %419 = vmatprep.subr.mxu0 0.0
        %420 = vmatpush1.msra.mxu0 0.0
        %421 = vmatprep.subr.mxu0 0.0
        %422 = vmatpush1.msra.mxu0 0.0
        %423 = vmatprep.subr.mxu0 0.0
        %424 = vmatpush1.msra.mxu0 0.0
        %425 = vmatprep.subr.mxu0 0.0
        %426 = vmatpush1.msra.mxu0 0.0
        %427 = vmatprep.subr.mxu0 0.0
        %428 = vmatpush1.msra.mxu0 0.0
        %429 = vmatprep.subr.mxu0 0.0
        %430 = vmatpush1.msra.mxu0 0.0
        %431 = vmatprep.subr.mxu0 0.0
        %432 = vmatpush1.msra.mxu0 0.0
        %433 = vmatprep.subr.mxu0 0.0
        %434 = vmatpush1.msra.mxu0 0.0
        %435 = vmatprep.subr.mxu0 0.0
        %436 = vmatpush1.msra.mxu0 0.0
        %437 = vmatprep.subr.mxu0 0.0
        %438 = vmatpush1.msra.mxu0 0.0
        %439 = vmatprep.subr.mxu0 0.0
        %440 = vmatpush1.msra.mxu0 0.0
        %441 = vmatprep.subr.mxu0 0.0
        %442 = vmatpush1.msra.mxu0 0.0
        %443 = vmatprep.subr.mxu0 0.0
        %444 = vmatpush1.msra.mxu0 %v415
        %445 = vmatprep.subr.mxu0 0.0
        %446 = vmatpush1.msra.mxu0 %v414
        %447 = vmatprep.subr.mxu0 0.0
        %448 = vmatpush1.msra.mxu0 %v413
        %449 = vmatprep.subr.mxu0 0.0
        %450 = vmatpush1.msra.mxu0 %v412
        %451 = vmatprep.subr.mxu0 0.0
        %452 = vmatpush2.msra.mxu0 0.0
        %453 = vmatprep.subr.mxu0 0.0
        %454 = vmatpush2.msra.mxu0 0.0
        %455 = vmatprep.subr.mxu0 0.0
        %456 = vmatpush2.msra.mxu0 0.0
        %457 = vmatprep.subr.mxu0 0.0
        %458 = vmatpush2.msra.mxu0 0.0
        %459 = vmatprep.subr.mxu0 0.0
        %460 = vmatpush2.msra.mxu0 0.0
        %461 = vmatprep.subr.mxu0 0.0
        %462 = vmatpush2.msra.mxu0 0.0
        %463 = vmatprep.subr.mxu0 0.0
        %464 = vmatpush2.msra.mxu0 0.0
        %465 = vmatprep.subr.mxu0 0.0
        %466 = vmatpush2.msra.mxu0 0.0
        %467 = vmatprep.subr.mxu0 0.0
        %468 = vmatpush2.msra.mxu0 0.0
        %469 = vmatprep.subr.mxu0 0.0
        %470 = vmatpush2.msra.mxu0 0.0
        %471 = vmatprep.subr.mxu0 0.0
        %472 = vmatpush2.msra.mxu0 0.0
        %473 = vmatprep.subr.mxu0 0.0
        %474 = vmatpush2.msra.mxu0 0.0
        %475 = vmatprep.subr.mxu0 0.0
        %476 = vmatpush2.msra.mxu0 0.0
        %477 = vmatprep.subr.mxu0 0.0
        %478 = vmatpush2.msra.mxu0 0.0
        %479 = vmatprep.subr.mxu0 0.0
        %480 = vmatpush2.msra.mxu0 0.0
        %481 = vmatprep.subr.mxu0 0.0
        %482 = vmatpush2.msra.mxu0 0.0
        %483 = vmatprep.mubr.f32.mxu0 0.0
        %484 = vmatmul.mubr.f32.gmra.mxu0 %v417
        %v485 = vpop.f32.mrf.mxu0
        %v486 = vadd.f32 0.0, %v485
        %v487 = vpop.f32.mrf.mxu0
        %488 = vdwg.mxu0
        %v489 = vadd.f32 %v411, %v486
        %vm490 = vcmask 57344
        %491 = vst.msk [vmem:[#allocation2] sm:$0x1] %vm490, %v489
        %v492 = vld [vmem:[#allocation3] sm:$0x1]
        %v493 = vld [vmem:[%s3] sm:$0xff]
        %v494 = vld [vmem:[%s3 + $0x8] sm:$0xff]
        %v495 = vld [vmem:[%s3 + $0x10] sm:$0xff]
        %v496 = vld [vmem:[%s3 + $0x18] sm:$0xff]
        %v498 = vsel %vm320, %v410, 0
        %500 = vmatprep.subr.mxu0 0.0
        %501 = vmatpush1.msra.mxu0 0.0
        %502 = vmatprep.subr.mxu0 0.0
        %503 = vmatpush1.msra.mxu0 0.0
        %504 = vmatprep.subr.mxu0 0.0
        %505 = vmatpush1.msra.mxu0 0.0
        %506 = vmatprep.subr.mxu0 0.0
        %507 = vmatpush1.msra.mxu0 0.0
        %508 = vmatprep.subr.mxu0 0.0
        %509 = vmatpush1.msra.mxu0 0.0
        %510 = vmatprep.subr.mxu0 0.0
        %511 = vmatpush1.msra.mxu0 0.0
        %512 = vmatprep.subr.mxu0 0.0
        %513 = vmatpush1.msra.mxu0 0.0
        %514 = vmatprep.subr.mxu0 0.0
        %515 = vmatpush1.msra.mxu0 0.0
        %516 = vmatprep.subr.mxu0 0.0
        %517 = vmatpush1.msra.mxu0 0.0
        %518 = vmatprep.subr.mxu0 0.0
        %519 = vmatpush1.msra.mxu0 0.0
        %520 = vmatprep.subr.mxu0 0.0
        %521 = vmatpush1.msra.mxu0 0.0
        %522 = vmatprep.subr.mxu0 0.0
        %523 = vmatpush1.msra.mxu0 0.0
        %524 = vmatprep.subr.mxu0 0.0
        %525 = vmatpush1.msra.mxu0 %v496
        %526 = vmatprep.subr.mxu0 0.0
        %527 = vmatpush1.msra.mxu0 %v495
        %528 = vmatprep.subr.mxu0 0.0
        %529 = vmatpush1.msra.mxu0 %v494
        %530 = vmatprep.subr.mxu0 0.0
        %531 = vmatpush1.msra.mxu0 %v493
        %532 = vmatprep.subr.mxu0 0.0
        %533 = vmatpush2.msra.mxu0 0.0
        %534 = vmatprep.subr.mxu0 0.0
        %535 = vmatpush2.msra.mxu0 0.0
        %536 = vmatprep.subr.mxu0 0.0
        %537 = vmatpush2.msra.mxu0 0.0
        %538 = vmatprep.subr.mxu0 0.0
        %539 = vmatpush2.msra.mxu0 0.0
        %540 = vmatprep.subr.mxu0 0.0
        %541 = vmatpush2.msra.mxu0 0.0
        %542 = vmatprep.subr.mxu0 0.0
        %543 = vmatpush2.msra.mxu0 0.0
        %544 = vmatprep.subr.mxu0 0.0
        %545 = vmatpush2.msra.mxu0 0.0
        %546 = vmatprep.subr.mxu0 0.0
        %547 = vmatpush2.msra.mxu0 0.0
        %548 = vmatprep.subr.mxu0 0.0
        %549 = vmatpush2.msra.mxu0 0.0
        %550 = vmatprep.subr.mxu0 0.0
        %551 = vmatpush2.msra.mxu0 0.0
        %552 = vmatprep.subr.mxu0 0.0
        %553 = vmatpush2.msra.mxu0 0.0
        %554 = vmatprep.subr.mxu0 0.0
        %555 = vmatpush2.msra.mxu0 0.0
        %556 = vmatprep.subr.mxu0 0.0
        %557 = vmatpush2.msra.mxu0 0.0
        %558 = vmatprep.subr.mxu0 0.0
        %559 = vmatpush2.msra.mxu0 0.0
        %560 = vmatprep.subr.mxu0 0.0
        %561 = vmatpush2.msra.mxu0 0.0
        %562 = vmatprep.subr.mxu0 0.0
        %563 = vmatpush2.msra.mxu0 0.0
        %564 = vmatprep.mubr.f32.mxu0 0.0
        %565 = vmatmul.mubr.f32.gmra.mxu0 %v498
        %v566 = vpop.f32.mrf.mxu0
        %v567 = vadd.f32 0.0, %v566
        %v568 = vpop.f32.mrf.mxu0
        %569 = vdwg.mxu0
        %v570 = vadd.f32 %v492, %v567
        %571 = vst.msk [vmem:[#allocation3] sm:$0x1] %vm490, %v570
        %p572 = scmp.eq.s32.totalorder %s32, 1
        // Predicated region
        $region49: #{tpu_custom_call.1} parent=39 // pred_check
          %p573 = pneg %p572
        $region50: #{tpu_custom_call.1} parent=39 // pred_check_branch
          %575 = sbr.rel (%p573) target = $region52
        $region51: #{tpu_custom_call.1} parent=39 // pred_region
          %v576 = vld [vmem:[#allocation2] sm:$0x1]
          %v577 = vmul.f32 %v576, 0.0009765625
          %v578 = vld [vmem:[#allocation3] sm:$0x1]
          %v579 = vmul.f32 %v578, 0.0009765625
          %v580 = vmul.f32 %v577, %v577
          %v581 = vsub.f32 %v579, %v580
          %v582 = vadd.f32 %v581, 1e-05
          %v583 = vrsqrt.pop %v582
          %v584 = vld [vmem:[%s4] sm:$0xff]
          %vm585 = vcmask 64512
          %v587 = vsel %vm585, %v577, 0
          %589 = vmatprep.subr.mxu0 0.0
          %590 = vmatpush1.msra.mxu0 0.0
          %591 = vmatprep.subr.mxu0 0.0
          %592 = vmatpush1.msra.mxu0 0.0
          %593 = vmatprep.subr.mxu0 0.0
          %594 = vmatpush1.msra.mxu0 0.0
          %595 = vmatprep.subr.mxu0 0.0
          %596 = vmatpush1.msra.mxu0 0.0
          %597 = vmatprep.subr.mxu0 0.0
          %598 = vmatpush1.msra.mxu0 0.0
          %599 = vmatprep.subr.mxu0 0.0
          %600 = vmatpush1.msra.mxu0 0.0
          %601 = vmatprep.subr.mxu0 0.0
          %602 = vmatpush1.msra.mxu0 0.0
          %603 = vmatprep.subr.mxu0 0.0
          %604 = vmatpush1.msra.mxu0 0.0
          %605 = vmatprep.subr.mxu0 0.0
          %606 = vmatpush1.msra.mxu0 0.0
          %607 = vmatprep.subr.mxu0 0.0
          %608 = vmatpush1.msra.mxu0 0.0
          %609 = vmatprep.subr.mxu0 0.0
          %610 = vmatpush1.msra.mxu0 0.0
          %611 = vmatprep.subr.mxu0 0.0
          %612 = vmatpush1.msra.mxu0 0.0
          %613 = vmatprep.subr.mxu0 0.0
          %614 = vmatpush1.msra.mxu0 0.0
          %615 = vmatprep.subr.mxu0 0.0
          %616 = vmatpush1.msra.mxu0 0.0
          %617 = vmatprep.subr.mxu0 0.0
          %618 = vmatpush1.msra.mxu0 0.0
          %619 = vmatprep.subr.mxu0 0.0
          %620 = vmatpush1.msra.mxu0 %v584
          %621 = vmatprep.subr.mxu0 0.0
          %622 = vmatpush2.msra.mxu0 0.0
          %623 = vmatprep.subr.mxu0 0.0
          %624 = vmatpush2.msra.mxu0 0.0
          %625 = vmatprep.subr.mxu0 0.0
          %626 = vmatpush2.msra.mxu0 0.0
          %627 = vmatprep.subr.mxu0 0.0
          %628 = vmatpush2.msra.mxu0 0.0
          %629 = vmatprep.subr.mxu0 0.0
          %630 = vmatpush2.msra.mxu0 0.0
          %631 = vmatprep.subr.mxu0 0.0
          %632 = vmatpush2.msra.mxu0 0.0
          %633 = vmatprep.subr.mxu0 0.0
          %634 = vmatpush2.msra.mxu0 0.0
          %635 = vmatprep.subr.mxu0 0.0
          %636 = vmatpush2.msra.mxu0 0.0
          %637 = vmatprep.subr.mxu0 0.0
          %638 = vmatpush2.msra.mxu0 0.0
          %639 = vmatprep.subr.mxu0 0.0
          %640 = vmatpush2.msra.mxu0 0.0
          %641 = vmatprep.subr.mxu0 0.0
          %642 = vmatpush2.msra.mxu0 0.0
          %643 = vmatprep.subr.mxu0 0.0
          %644 = vmatpush2.msra.mxu0 0.0
          %645 = vmatprep.subr.mxu0 0.0
          %646 = vmatpush2.msra.mxu0 0.0
          %647 = vmatprep.subr.mxu0 0.0
          %648 = vmatpush2.msra.mxu0 0.0
          %649 = vmatprep.subr.mxu0 0.0
          %650 = vmatpush2.msra.mxu0 0.0
          %651 = vmatprep.subr.mxu0 0.0
          %652 = vmatpush2.msra.mxu0 0.0
          %653 = vmatprep.mubr.f32.mxu0 0.0
          %654 = vmatmul.mubr.f32.gmra.mxu0 %v587
          %v655 = vpop.f32.mrf.mxu0
          %v656 = vadd.f32 0.0, %v655
          %v657 = vpop.f32.mrf.mxu0
          %658 = vdwg.mxu0
          %v660 = vsel %vm585, %v583, 0
          %662 = vmatprep.subr.mxu0 0.0
          %663 = vmatpush1.msra.mxu0 0.0
          %664 = vmatprep.subr.mxu0 0.0
          %665 = vmatpush1.msra.mxu0 0.0
          %666 = vmatprep.subr.mxu0 0.0
          %667 = vmatpush1.msra.mxu0 0.0
          %668 = vmatprep.subr.mxu0 0.0
          %669 = vmatpush1.msra.mxu0 0.0
          %670 = vmatprep.subr.mxu0 0.0
          %671 = vmatpush1.msra.mxu0 0.0
          %672 = vmatprep.subr.mxu0 0.0
          %673 = vmatpush1.msra.mxu0 0.0
          %674 = vmatprep.subr.mxu0 0.0
          %675 = vmatpush1.msra.mxu0 0.0
          %676 = vmatprep.subr.mxu0 0.0
          %677 = vmatpush1.msra.mxu0 0.0
          %678 = vmatprep.subr.mxu0 0.0
          %679 = vmatpush1.msra.mxu0 0.0
          %680 = vmatprep.subr.mxu0 0.0
          %681 = vmatpush1.msra.mxu0 0.0
          %682 = vmatprep.subr.mxu0 0.0
          %683 = vmatpush1.msra.mxu0 0.0
          %684 = vmatprep.subr.mxu0 0.0
          %685 = vmatpush1.msra.mxu0 0.0
          %686 = vmatprep.subr.mxu0 0.0
          %687 = vmatpush1.msra.mxu0 0.0
          %688 = vmatprep.subr.mxu0 0.0
          %689 = vmatpush1.msra.mxu0 0.0
          %690 = vmatprep.subr.mxu0 0.0
          %691 = vmatpush1.msra.mxu0 0.0
          %692 = vmatprep.subr.mxu0 0.0
          %693 = vmatpush1.msra.mxu0 %v584
          %694 = vmatprep.subr.mxu0 0.0
          %695 = vmatpush2.msra.mxu0 0.0
          %696 = vmatprep.subr.mxu0 0.0
          %697 = vmatpush2.msra.mxu0 0.0
          %698 = vmatprep.subr.mxu0 0.0
          %699 = vmatpush2.msra.mxu0 0.0
          %700 = vmatprep.subr.mxu0 0.0
          %701 = vmatpush2.msra.mxu0 0.0
          %702 = vmatprep.subr.mxu0 0.0
          %703 = vmatpush2.msra.mxu0 0.0
          %704 = vmatprep.subr.mxu0 0.0
          %705 = vmatpush2.msra.mxu0 0.0
          %706 = vmatprep.subr.mxu0 0.0
          %707 = vmatpush2.msra.mxu0 0.0
          %708 = vmatprep.subr.mxu0 0.0
          %709 = vmatpush2.msra.mxu0 0.0
          %710 = vmatprep.subr.mxu0 0.0
          %711 = vmatpush2.msra.mxu0 0.0
          %712 = vmatprep.subr.mxu0 0.0
          %713 = vmatpush2.msra.mxu0 0.0
          %714 = vmatprep.subr.mxu0 0.0
          %715 = vmatpush2.msra.mxu0 0.0
          %716 = vmatprep.subr.mxu0 0.0
          %717 = vmatpush2.msra.mxu0 0.0
          %718 = vmatprep.subr.mxu0 0.0
          %719 = vmatpush2.msra.mxu0 0.0
          %720 = vmatprep.subr.mxu0 0.0
          %721 = vmatpush2.msra.mxu0 0.0
          %722 = vmatprep.subr.mxu0 0.0
          %723 = vmatpush2.msra.mxu0 0.0
          %724 = vmatprep.subr.mxu0 0.0
          %725 = vmatpush2.msra.mxu0 0.0
          %726 = vmatprep.mubr.f32.mxu0 0.0
          %727 = vmatmul.mubr.f32.gmra.mxu0 %v660
          %v728 = vpop.f32.mrf.mxu0
          %v729 = vadd.f32 0.0, %v728
          %v730 = vpop.f32.mrf.mxu0
          %731 = vdwg.mxu0
          %v732 = vld [vmem:[%s1] sm:$0x1]
          %v733 = vmul.f32 %v732, %v729
          %v734 = vld [vmem:[%s2] sm:$0x1]
          %v735 = vmul.f32 %v656, %v733
          %v736 = vsub.f32 %v734, %v735
          %vm737 = vcmask 253952
          %738 = vst.msk [vmem:[%s289] sm:$0x1] %vm737, %v733
          %739 = vst.msk [vmem:[%s295] sm:$0x1] %vm737, %v736
        $region52: #{tpu_custom_call.1} parent=39 // pred_fallthru
          _
        %s740 = sand.u32 %s159, 1
        %s741 = scalar_lea.sflag [#allocation6], %s740
        %s742 = sand.u32 %s159, 1
        %s743 = scalar_lea.vmem [#allocation7], %s742
        %s744 = sand.u32 %s185, 1
        %s745 = scalar_lea.sflag [#allocation9], %s744
        %s746 = sand.u32 %s185, 1
        %s747 = scalar_lea.vmem [#allocation8], %s746
        // Predicated region
        $region53: #{tpu_custom_call.1} parent=39 // pred_check
          %p748 = pneg %p169
        $region54: #{tpu_custom_call.1} parent=39 // pred_check_branch
          %750 = sbr.rel (%p748) target = $region56
        $region55: #{tpu_custom_call.1} parent=39 // pred_region
          %s752 = ssub.s32 16, 16
          %753 = vsyncadd %s741, %s752
          %s754 = smul.addr %s31, 16
          %s755 = scalar_lea.hbm %s5, %s754
          %s757 = sshll.u32 %s743, 4
          %s758 = int_to_ptr.vmem [resolvable:$true] %s757
          %760 = dma.vmem_to_hbm [thread:$0]  %s758, 16, %s755, %s741
        $region56: #{tpu_custom_call.1} parent=39 // pred_fallthru
          _
        // Predicated region
        $region57: #{tpu_custom_call.1} parent=39 // pred_check
          %p761 = pneg %p195
        $region58: #{tpu_custom_call.1} parent=39 // pred_check_branch
          %763 = sbr.rel (%p761) target = $region60
        $region59: #{tpu_custom_call.1} parent=39 // pred_region
          %s765 = ssub.s32 16, 16
          %766 = vsyncadd %s745, %s765
          %s767 = smul.addr %s31, 16
          %s768 = scalar_lea.hbm %s6, %s767
          %s770 = sshll.u32 %s747, 4
          %s771 = int_to_ptr.vmem [resolvable:$true] %s770
          %773 = dma.vmem_to_hbm [thread:$0]  %s771, 16, %s768, %s745
        $region60: #{tpu_custom_call.1} parent=39 // pred_fallthru
          _
      $region40: #{tpu_custom_call.1} parent=5 // pred_fallthru
        _
      %p774 = scmp.le.s32.totalorder 2, %s22
      // Predicated region
      $region61: #{tpu_custom_call.1} parent=5 // pred_check
        %p775 = pneg %p774
      $region62: #{tpu_custom_call.1} parent=5 // pred_check_branch
        %777 = sbr.rel (%p775) target = $region64
      $region63: #{tpu_custom_call.1} parent=5 // pred_region
        %s778 = ssub.s32 %s22, 2
        // Predicated region
        $region65: #{tpu_custom_call.1} parent=63 // pred_check
          %p779 = pneg %p175
        $region66: #{tpu_custom_call.1} parent=63 // pred_check_branch
          %781 = sbr.rel (%p779) target = $region68
        $region67: #{tpu_custom_call.1} parent=63 // pred_region
          %s782 = sand.u32 %s160, 1
          %s783 = scalar_lea.sflag [#allocation6], %s782
          %s784 = sand.u32 %s160, 1
          %s785 = scalar_lea.vmem [#allocation7], %s784
          %786 = dma.done %s783, 16
        $region68: #{tpu_custom_call.1} parent=63 // pred_fallthru
          _
        // Predicated region
        $region69: #{tpu_custom_call.1} parent=63 // pred_check
          %p787 = pneg %p201
        $region70: #{tpu_custom_call.1} parent=63 // pred_check_branch
          %789 = sbr.rel (%p787) target = $region72
        $region71: #{tpu_custom_call.1} parent=63 // pred_region
          %s790 = sand.u32 %s186, 1
          %s791 = scalar_lea.sflag [#allocation9], %s790
          %s792 = sand.u32 %s186, 1
          %s793 = scalar_lea.vmem [#allocation8], %s792
          %794 = dma.done %s791, 16
        $region72: #{tpu_custom_call.1} parent=63 // pred_fallthru
          _
      $region64: #{tpu_custom_call.1} parent=5 // pred_fallthru
        _
    $region6: #{tpu_custom_call.1} parent=1 // loop_footer
      %s26 = sadd.s32 1, %s22
    $region7: #{tpu_custom_call.1} parent=1 // loop_footer_branch
      %21 = sbr.rel target = $region3
    $region8: #{tpu_custom_call.1} parent=1 // loop_exit
      _
    %795 = vsyncpa [#allocation5], 1
    %s796 = scalar_lea.sflag [#allocation5], 1
    %797 = vsyncpa %s796, 1
    %798 = vsyncpa [#allocation6], 1
    %s799 = scalar_lea.sflag [#allocation6], 1
    %800 = vsyncpa %s799, 1
    %801 = vsyncpa [#allocation9], 1
    %s802 = scalar_lea.sflag [#allocation9], 1
    %803 = vsyncpa %s802, 1

</llo_original>
